<compile_context>
chip_gen: v7x
topology: tpu7x:2x2x1
jax: 0.10.0
libtpu: 0.0.40
codegen_flags: <defaults>
</compile_context>

<pallas_src>
import jax
import jax.numpy as jnp
from jax.experimental import pallas as pl
from jax.experimental.pallas import tpu as pltpu


def _cdiv(a, b):
    return -(-a // b)


def _round_up(a, b):
    return _cdiv(a, b) * b


def _vmem_config():
    """Returns (per-step tile budget bytes, vmem_limit_bytes, likely 2-TC chip)."""
    try:
        capacity = pltpu.get_tpu_info().vmem_capacity_bytes
    except Exception:
        capacity = None
    if capacity is None:
        # Conservative default that is safe on every generation (v7x has 64 MiB).
        return 40 << 20, 48 << 20, False
    if capacity >= (96 << 20):
        # v5e / v6e: 128 MiB physical VMEM, single TensorCore per chip.
        return 96 << 20, 112 << 20, False
    # v7x-like: 64 MiB physical VMEM, 2 TensorCores per chip.
    return 40 << 20, 48 << 20, True


def _minmax_kernel(x_ref, o_ref, loc_ref, sinv_ref):
    """Single-pass kernel: full batch resident; reduce over axis 0 of the block.

    Works for both the 2-D (N, tile_d) and the sublane-dense 3-D (N, tr, 128)
    layouts (the body is rank-agnostic).
    """
    x = x_ref[...].astype(jnp.float32)
    xmin = jnp.min(x, axis=0, keepdims=True)
    xmax = jnp.max(x, axis=0, keepdims=True)
    # (xmax - xmin).clamp_min(1e-5).reciprocal() -- exact divide, not approx.
    sinv = 1.0 / jnp.maximum(xmax - xmin, jnp.float32(1e-5))
    o_ref[...] = ((x - xmin) * sinv).astype(o_ref.dtype)
    loc_ref[...] = xmin.astype(loc_ref.dtype)
    sinv_ref[...] = sinv.astype(sinv_ref.dtype)


def _two_pass_forward(x2d, vmem_limit):
    """Chunked-N two-pass path (reduce + apply) for batches that do not fit
    resident per feature tile. Costs ~1.5x the single-pass HBM traffic but keeps
    tiles small and pipelined for any N."""
    N, D = x2d.shape
    itemsize = jnp.dtype(x2d.dtype).itemsize
    sub = max(8, 32 // itemsize)                 # sublane granularity for dtype

    # Small, always-VMEM-safe tiles (<= ~14 MiB per step even in f32).
    tile_d = D if D <= 1024 else 1024            # full-dim block or 128-multiple
    tn = N if N <= sub else min(512, (N // sub) * sub)
    d_tiles = _cdiv(D, tile_d)
    n_chunks = _cdiv(N, tn)
    needs_mask = (n_chunks * tn) != N            # ragged last N-chunk -> mask rows

    # ---- pass 1: per-feature min / max over N (N axis is the reduction axis) ----
    def reduce_kernel(x_ref, loc_ref, sinv_ref, max_ref):
        j = pl.program_id(1)                     # N-chunk index (last grid axis)
        x = x_ref[...].astype(jnp.float32)
        if needs_mask:
            row = jax.lax.broadcasted_iota(jnp.int32, x.shape, 0) + j * tn
            valid = row < N
            x_for_min = jnp.where(valid, x, jnp.float32(jnp.inf))
            x_for_max = jnp.where(valid, x, jnp.float32(-jnp.inf))
        else:
            x_for_min = x
            x_for_max = x
        bmin = jnp.min(x_for_min, axis=0, keepdims=True)
        bmax = jnp.max(x_for_max, axis=0, keepdims=True)

        @pl.when(j == 0)
        def _():
            loc_ref[...] = bmin
            max_ref[...] = bmax

        @pl.when(j > 0)
        def _():
            loc_ref[...] = jnp.minimum(loc_ref[...], bmin)
            max_ref[...] = jnp.maximum(max_ref[...], bmax)

        @pl.when(j == pl.num_programs(1) - 1)
        def _():
            sinv_ref[...] = 1.0 / jnp.maximum(max_ref[...] - loc_ref[...],
                                              jnp.float32(1e-5))

    loc2d, sinv2d = pl.pallas_call(
        reduce_kernel,
        out_shape=(
            jax.ShapeDtypeStruct((1, D), jnp.float32),
            jax.ShapeDtypeStruct((1, D), jnp.float32),
        ),
        grid_spec=pltpu.PrefetchScalarGridSpec(
            num_scalar_prefetch=0,
            grid=(d_tiles, n_chunks),
            in_specs=[pl.BlockSpec((tn, tile_d), lambda i, j: (j, i))],
            out_specs=[
                pl.BlockSpec((1, tile_d), lambda i, j: (0, i)),
                pl.BlockSpec((1, tile_d), lambda i, j: (0, i)),
            ],
            scratch_shapes=[pltpu.VMEM((1, tile_d), jnp.float32)],
        ),
        compiler_params=pltpu.CompilerParams(
            dimension_semantics=("parallel", "arbitrary"),
            vmem_limit_bytes=vmem_limit,
        ),
        cost_estimate=pl.CostEstimate(
            flops=2 * N * D, transcendentals=D,
            bytes_accessed=N * D * itemsize + 8 * D),
    )(x2d)

    # ---- pass 2: apply (x - loc) * scale_inv, fully parallel ----
    def apply_kernel(x_ref, loc_ref, sinv_ref, o_ref):
        x = x_ref[...].astype(jnp.float32)
        o_ref[...] = ((x - loc_ref[...]) * sinv_ref[...]).astype(o_ref.dtype)

    out2d = pl.pallas_call(
        apply_kernel,
        out_shape=jax.ShapeDtypeStruct((N, D), x2d.dtype),
        grid_spec=pltpu.PrefetchScalarGridSpec(
            num_scalar_prefetch=0,
            grid=(n_chunks, d_tiles),
            in_specs=[
                pl.BlockSpec((tn, tile_d), lambda i, j: (i, j)),
                pl.BlockSpec((1, tile_d), lambda i, j: (0, j)),
                pl.BlockSpec((1, tile_d), lambda i, j: (0, j)),
            ],
            out_specs=pl.BlockSpec((tn, tile_d), lambda i, j: (i, j)),
        ),
        compiler_params=pltpu.CompilerParams(
            dimension_semantics=("parallel", "parallel"),
            vmem_limit_bytes=vmem_limit,
        ),
        cost_estimate=pl.CostEstimate(
            flops=2 * N * D, transcendentals=0,
            bytes_accessed=2 * N * D * itemsize + 8 * D),
    )(x2d, loc2d, sinv2d)

    return out2d, loc2d, sinv2d


def minmax_scaler_forward(x, *, force_two_pass=False):
    """First-run (training) forward of MinMaxScaler.

    x: (N, *feat_shape) float array.
    Returns (out, loc, scale_inv): out has x.shape/dtype; loc, scale_inv are
    float32 with feat_shape (matching the module's buffer dtype).
    """
    N = x.shape[0]
    feat_shape = x.shape[1:]
    D = 1
    for s in feat_shape:
        D *= s
    x2d = x.reshape(N, D)

    budget, vmem_limit, two_tc = _vmem_config()
    itemsize = jnp.dtype(x.dtype).itemsize
    sub = max(8, 32 // itemsize)                 # sublane granularity for dtype

    cost = pl.CostEstimate(
        flops=4 * N * D,
        transcendentals=D,
        bytes_accessed=2 * N * D * itemsize + 8 * D,
    )

    use_3d = (D >= 128) and (D % 128 == 0)

    # ---- pick a single-pass (full batch resident per feature tile) plan ----
    plan = None
    if not force_two_pass:
        if use_3d:
            R = D // 128
            # Per 128-lane feature row: double-buffered in+out tiles, f32 compute
            # temporaries, and the two double-buffered (1, ., 128) stat rows.
            per_row = 128 * (4 * N * itemsize + 2 * N * 4 + 16)
            max_rows = budget // per_row
            if R <= sub:
                if max_rows >= R:
                    plan = ("3d", R)
            elif max_rows >= R:
                tr = R
                if two_tc:
                    # keep >= 2 grid steps only on 2-TC chips (v7x) so both
                    # TensorCores share the feature axis
                    tr = max(sub, _round_up(_cdiv(R, 2), sub))
                plan = ("3d", tr)
            else:
                tr = (max_rows // sub) * sub
                if tr > 0:
                    plan = ("3d", tr)
        else:
            n_io = _round_up(N, sub)             # sublane-padded VMEM footprint
            n_f32 = _round_up(N, 8)
            per_feat = 4 * n_io * itemsize + 2 * n_f32 * 4 + 16
            max_feat = budget // per_feat
            if D <= 128:
                if max_feat >= D:
                    plan = ("2d", D)
            elif max_feat >= D:
                tile_d = D
                if two_tc:
                    tile_d = max(128, _round_up(_cdiv(D, 2), 128))
                plan = ("2d", tile_d)
            else:
                tile_d = (max_feat // 128) * 128
                if tile_d > 0:
                    plan = ("2d", tile_d)

    if plan is not None and plan[0] == "3d":
        R = D // 128
        tr = plan[1]
        x3d = x2d.reshape(N, R, 128)             # feature rows on the sublane axis
        out3d, loc3d, sinv3d = pl.pallas_call(
            _minmax_kernel,
            out_shape=(
                jax.ShapeDtypeStruct((N, R, 128), x.dtype),
                jax.ShapeDtypeStruct((1, R, 128), jnp.float32),
                jax.ShapeDtypeStruct((1, R, 128), jnp.float32),
            ),
            grid_spec=pltpu.PrefetchScalarGridSpec(
                num_scalar_prefetch=0,
                grid=(_cdiv(R, tr),),
                in_specs=[pl.BlockSpec((N, tr, 128), lambda i: (0, i, 0))],
                out_specs=[
                    pl.BlockSpec((N, tr, 128), lambda i: (0, i, 0)),
                    pl.BlockSpec((1, tr, 128), lambda i: (0, i, 0)),
                    pl.BlockSpec((1, tr, 128), lambda i: (0, i, 0)),
                ],
            ),
            compiler_params=pltpu.CompilerParams(
                dimension_semantics=("parallel",),
                vmem_limit_bytes=vmem_limit,
            ),
            cost_estimate=cost,
        )(x3d)
        return (out3d.reshape(x.shape),
                loc3d.reshape(feat_shape),
                sinv3d.reshape(feat_shape))

    if plan is not None and plan[0] == "2d":
        tile_d = plan[1]
        out2d, loc2d, sinv2d = pl.pallas_call(
            _minmax_kernel,
            out_shape=(
                jax.ShapeDtypeStruct((N, D), x.dtype),
                jax.ShapeDtypeStruct((1, D), jnp.float32),
                jax.ShapeDtypeStruct((1, D), jnp.float32),
            ),
            grid_spec=pltpu.PrefetchScalarGridSpec(
                num_scalar_prefetch=0,
                grid=(_cdiv(D, tile_d),),
                in_specs=[pl.BlockSpec((N, tile_d), lambda i: (0, i))],
                out_specs=[
                    pl.BlockSpec((N, tile_d), lambda i: (0, i)),
                    pl.BlockSpec((1, tile_d), lambda i: (0, i)),
                    pl.BlockSpec((1, tile_d), lambda i: (0, i)),
                ],
            ),
            compiler_params=pltpu.CompilerParams(
                dimension_semantics=("parallel",),
                vmem_limit_bytes=vmem_limit,
            ),
            cost_estimate=cost,
        )(x2d)
        return (out2d.reshape(x.shape),
                loc2d.reshape(feat_shape),
                sinv2d.reshape(feat_shape))

    # Batch does not fit resident per feature tile (or forced): two-pass fallback.
    out2d, loc2d, sinv2d = _two_pass_forward(x2d, vmem_limit)
    return (out2d.reshape(x.shape),
            loc2d.reshape(feat_shape),
            sinv2d.reshape(feat_shape))


def _reference(x):
    xmin = jnp.min(x, axis=0)
    xmax = jnp.max(x, axis=0)
    scale_inv = 1.0 / jnp.maximum(xmax - xmin, 1e-5)
    return (x - xmin) * scale_inv, xmin, scale_inv


def _check(x, **kw):
    out, loc, sinv = minmax_scaler_forward(x, **kw)
    jax.block_until_ready((out, loc, sinv))
    ref_out, ref_loc, ref_sinv = _reference(x)
    assert jnp.allclose(loc, ref_loc, atol=1e-6, rtol=1e-6), "loc mismatch"
    assert jnp.allclose(sinv, ref_sinv, atol=1e-4, rtol=1e-4), "scale_inv mismatch"
    assert jnp.allclose(out, ref_out, atol=1e-4, rtol=1e-4), "out mismatch"


if __name__ == "__main__":
    key = jax.random.PRNGKey(0)
    k0, k1 = jax.random.split(key)

    # Main case implied by the module usage: (N, C, H, W) with D = C*H*W = 1024
    # -> sublane-dense (N, D//128, 128) single-pass path.
    x = jax.random.normal(k0, (2, 4, 16, 16), dtype=jnp.float32)
    _check(x)

    # Ragged-D case (D = 300, not a multiple of 128) -> divisor-free 2-D path,
    # no pad / slice passes.
    x_ragged = jax.random.normal(k1, (12, 3, 10, 10), dtype=jnp.float32)
    _check(x_ragged)

    # Large-N fallback (chunked-N reduce + parallel apply), forced here so the
    # path is exercised and verified (covers masked ragged N-chunks too).
    _check(x, force_two_pass=True)
    _check(x_ragged, force_two_pass=True)

    print("KERNEL_OK")
</pallas_src>

<mosaic_0001>
module attributes {stable_mosaic.version = 11 : i64} {
  func.func @_minmax_kernel(%arg0: i32, %arg1: memref<2x8x128xf32, #tpu.memory_space<vmem>>, %arg2: memref<2x8x128xf32, #tpu.memory_space<vmem>>, %arg3: memref<1x8x128xf32, #tpu.memory_space<vmem>>, %arg4: memref<1x8x128xf32, #tpu.memory_space<vmem>>) attributes {dimension_semantics = [#tpu.dimension_semantics<parallel>], iteration_bounds = array<i64: 1>, scalar_prefetch = 0 : i64, scratch_operands = 0 : i64, tpu.core_type = #tpu.core_type<tc>, window_params = [{transform_indices = @transform_0, window_bounds = array<i64: 2, 8, 128>}, {transform_indices = @transform_1, window_bounds = array<i64: 2, 8, 128>}, {transform_indices = @transform_2, window_bounds = array<i64: 1, 8, 128>}, {transform_indices = @transform_3, window_bounds = array<i64: 1, 8, 128>}]} {
    %c0 = arith.constant 0 : index
    %c0_0 = arith.constant 0 : index
    %c0_1 = arith.constant 0 : index
    %0 = vector.load %arg1[%c0, %c0_0, %c0_1] : memref<2x8x128xf32, #tpu.memory_space<vmem>>, vector<2x8x128xf32>
    %cst = arith.constant dense<0x7F800000> : vector<8x128xf32>
    %1 = vector.multi_reduction <minimumf>, %0, %cst [0] : vector<2x8x128xf32> to vector<8x128xf32>
    %2 = vector.shape_cast %1 : vector<8x128xf32> to vector<1x8x128xf32>
    %cst_2 = arith.constant dense<0xFF800000> : vector<8x128xf32>
    %3 = vector.multi_reduction <maximumf>, %0, %cst_2 [0] : vector<2x8x128xf32> to vector<8x128xf32>
    %4 = vector.shape_cast %3 : vector<8x128xf32> to vector<1x8x128xf32>
    %5 = arith.subf %4, %2 : vector<1x8x128xf32>
    %cst_3 = arith.constant 9.99999974E-6 : f32
    %6 = vector.broadcast %cst_3 : f32 to vector<1x8x128xf32>
    %7 = arith.maximumf %5, %6 : vector<1x8x128xf32>
    %cst_4 = arith.constant 1.000000e+00 : f32
    %8 = vector.broadcast %cst_4 : f32 to vector<1x8x128xf32>
    %9 = arith.divf %8, %7 : vector<1x8x128xf32>
    %10 = vector.broadcast %2 : vector<1x8x128xf32> to vector<2x8x128xf32>
    %11 = arith.subf %0, %10 : vector<2x8x128xf32>
    %12 = vector.broadcast %9 : vector<1x8x128xf32> to vector<2x8x128xf32>
    %13 = arith.mulf %11, %12 : vector<2x8x128xf32>
    %c0_5 = arith.constant 0 : index
    %c0_6 = arith.constant 0 : index
    %c0_7 = arith.constant 0 : index
    %14 = vector.load %arg2[%c0_5, %c0_6, %c0_7] : memref<2x8x128xf32, #tpu.memory_space<vmem>>, vector<2x8x128xf32>
    tpu.vector_store %arg2[%c0_5, %c0_6, %c0_7], %13 {strides = array<i32>} : memref<2x8x128xf32, #tpu.memory_space<vmem>>, vector<2x8x128xf32>,
    %c0_8 = arith.constant 0 : index
    %c0_9 = arith.constant 0 : index
    %c0_10 = arith.constant 0 : index
    %15 = vector.load %arg3[%c0_8, %c0_9, %c0_10] : memref<1x8x128xf32, #tpu.memory_space<vmem>>, vector<1x8x128xf32>
    tpu.vector_store %arg3[%c0_8, %c0_9, %c0_10], %2 {strides = array<i32>} : memref<1x8x128xf32, #tpu.memory_space<vmem>>, vector<1x8x128xf32>,
    %c0_11 = arith.constant 0 : index
    %c0_12 = arith.constant 0 : index
    %c0_13 = arith.constant 0 : index
    %16 = vector.load %arg4[%c0_11, %c0_12, %c0_13] : memref<1x8x128xf32, #tpu.memory_space<vmem>>, vector<1x8x128xf32>
    tpu.vector_store %arg4[%c0_11, %c0_12, %c0_13], %9 {strides = array<i32>} : memref<1x8x128xf32, #tpu.memory_space<vmem>>, vector<1x8x128xf32>,
    return
  }
  func.func @transform_0(%arg0: i32) -> (i32, i32, i32) {
    %c0_i32 = arith.constant 0 : i32
    %c0_i32_0 = arith.constant 0 : i32
    %c0_i32_1 = arith.constant 0 : i32
    return %c0_i32, %arg0, %c0_i32_0 : i32, i32, i32
  }
  func.func @transform_1(%arg0: i32) -> (i32, i32, i32) {
    %c0_i32 = arith.constant 0 : i32
    %c0_i32_0 = arith.constant 0 : i32
    %c0_i32_1 = arith.constant 0 : i32
    return %c0_i32, %arg0, %c0_i32_0 : i32, i32, i32
  }
  func.func @transform_2(%arg0: i32) -> (i32, i32, i32) {
    %c0_i32 = arith.constant 0 : i32
    %c0_i32_0 = arith.constant 0 : i32
    %c0_i32_1 = arith.constant 0 : i32
    return %c0_i32, %arg0, %c0_i32_0 : i32, i32, i32
  }
  func.func @transform_3(%arg0: i32) -> (i32, i32, i32) {
    %c0_i32 = arith.constant 0 : i32
    %c0_i32_0 = arith.constant 0 : i32
    %c0_i32_1 = arith.constant 0 : i32
    return %c0_i32, %arg0, %c0_i32_0 : i32, i32, i32
  }
}

</mosaic_0001>

<llo_original>
// kernel: tpu_custom_call.1
$region0: #{tpu_custom_call.1}
  #allocation0 [shape = 'u32[]', space=smem, size = 0x4, offset = 0x4, fixed_abs, tag = 'smem constant byte address 0x4 - core index']
  #allocation1 [shape = 'u32[144,128]{1,0:T(1,128)}', space=vmem, size = 0x12000, scoped, tag = 'internal scratch']
  %s0 = inlined_call_operand.hbm [shape: f32[2,8,128], index: 0, kind: input, shape index: {}]
  %s1 = inlined_call_operand.hbm [shape: f32[2,8,128], index: 1, kind: output, shape index: {0}]
  %s2 = inlined_call_operand.hbm [shape: f32[1,8,128], index: 2, kind: output, shape index: {1}]
  %s3 = inlined_call_operand.hbm [shape: f32[1,8,128], index: 3, kind: output, shape index: {2}]
  %4 = xla_tuple %s1, %s2, %s3
  %s5 = sld [smem:[#allocation0]]
  $region34: #{tpu_custom_call.1} parent=0
    _
  %s7 = ssub.s32 1, %s5
  %s8 = scalar_select 0, %s7, %s5
  $region1: #{tpu_custom_call.1} parent=0
    #allocation2 [shape = 'u8[8192]{0}', space=vmem, size = 0x2000, scoped, tag = 'input window, operand 0, single buffered']
    #allocation3 [shape = 's32[1]{0}', space=sflag, size = 0x4, scoped, tag = 'scoped memory for tpu_custom_call.1']
    #allocation4 [shape = 's32[1]{0}', space=sflag, size = 0x4, scoped, tag = 'scoped memory for tpu_custom_call.1']
    #allocation5 [shape = 'u8[8192]{0}', space=vmem, size = 0x2000, scoped, tag = 'output window, operand 0, single buffered']
    #allocation6 [shape = 'u8[4096]{0}', space=vmem, size = 0x1000, scoped, tag = 'output window, operand 1, single buffered']
    #allocation7 [shape = 's32[1]{0}', space=sflag, size = 0x4, scoped, tag = 'scoped memory for tpu_custom_call.1']
    #allocation8 [shape = 'u8[4096]{0}', space=vmem, size = 0x1000, scoped, tag = 'output window, operand 2, single buffered']
    %9 = vsyncpa [#allocation3], 0
    %10 = vsyncpa [#allocation4], 0
    %11 = vsyncpa [#allocation7], 0
    // Predicated region
    $region2: #{tpu_custom_call.1} parent=1 // pred_check
      _
    $region3: #{tpu_custom_call.1} parent=1 // pred_check_branch
      %13 = sbr.rel (0) target = $region5
    $region4: #{tpu_custom_call.1} parent=1 // pred_region
      %s15 = ssub.s32 256, 256
      %16 = vsyncadd [#allocation3], %s15
      %s17 = sshll.u32 [#allocation2], 4
      %s18 = int_to_ptr.vmem [resolvable:$true] %s17
      %23 = dma.hbm_to_vmem [thread:$0]  %s0, 256, %s18, [#allocation3], 128, 128, 8
    $region5: #{tpu_custom_call.1} parent=1 // pred_fallthru
      _
    // Predicated region
    $region6: #{tpu_custom_call.1} parent=1 // pred_check
      _
    $region7: #{tpu_custom_call.1} parent=1 // pred_check_branch
      %25 = sbr.rel (0) target = $region9
    $region8: #{tpu_custom_call.1} parent=1 // pred_region
      %26 = dma.done [#allocation3], 256
    $region9: #{tpu_custom_call.1} parent=1 // pred_fallthru
      _
    %v27 = vld [vmem:[#allocation2] sm:$0xff]
    %v28 = vld [vmem:[#allocation2 + $0x8] sm:$0xff]
    %v29 = vmin.f32 %v27, %v28
    %v30 = vmax.f32 %v27, %v28
    %v31 = vsub.f32 %v30, %v29
    %v32 = vmax.f32 %v31, 1e-05
    %v33 = vrcp.pop %v32
    %v34 = vmul.f32 1.0, %v33
    %v35 = vsub.f32 %v27, %v29
    %v36 = vsub.f32 %v28, %v29
    %v37 = vmul.f32 %v35, %v34
    %v38 = vmul.f32 %v36, %v34
    %39 = vst [vmem:[#allocation5] sm:$0xff] %v37
    %40 = vst [vmem:[#allocation5 + $0x8] sm:$0xff] %v38
    %41 = vst [vmem:[#allocation6] sm:$0xff] %v29
    %42 = vst [vmem:[#allocation8] sm:$0xff] %v34
    // Predicated region
    $region10: #{tpu_custom_call.1} parent=1 // pred_check
      _
    $region11: #{tpu_custom_call.1} parent=1 // pred_check_branch
      %44 = sbr.rel (0) target = $region13
    $region12: #{tpu_custom_call.1} parent=1 // pred_region
      %s46 = ssub.s32 256, 256
      %47 = vsyncadd [#allocation4], %s46
      %s48 = sshll.u32 [#allocation5], 4
      %s49 = int_to_ptr.vmem [resolvable:$true] %s48
      %54 = dma.vmem_to_hbm [thread:$0]  %s49, 256, %s1, [#allocation4], 128, 128, 8
    $region13: #{tpu_custom_call.1} parent=1 // pred_fallthru
      _
    // Predicated region
    $region14: #{tpu_custom_call.1} parent=1 // pred_check
      _
    $region15: #{tpu_custom_call.1} parent=1 // pred_check_branch
      %56 = sbr.rel (0) target = $region17
    $region16: #{tpu_custom_call.1} parent=1 // pred_region
      %s58 = ssub.s32 128, 128
      %59 = vsyncadd [#allocation7], %s58
      %s61 = sshll.u32 [#allocation6], 4
      %s62 = int_to_ptr.vmem [resolvable:$true] %s61
      %64 = dma.vmem_to_hbm [thread:$0]  %s62, 128, %s2, [#allocation7]
    $region17: #{tpu_custom_call.1} parent=1 // pred_fallthru
      _
    // Predicated region
    $region18: #{tpu_custom_call.1} parent=1 // pred_check
      _
    $region19: #{tpu_custom_call.1} parent=1 // pred_check_branch
      %66 = sbr.rel (0) target = $region21
    $region20: #{tpu_custom_call.1} parent=1 // pred_region
      %s68 = ssub.s32 128, 128
      %69 = vsyncadd [#allocation7], %s68
      %s71 = sshll.u32 [#allocation8], 4
      %s72 = int_to_ptr.vmem [resolvable:$true] %s71
      %74 = dma.vmem_to_hbm [thread:$0]  %s72, 128, %s3, [#allocation7]
    $region21: #{tpu_custom_call.1} parent=1 // pred_fallthru
      _
    // Predicated region
    $region22: #{tpu_custom_call.1} parent=1 // pred_check
      _
    $region23: #{tpu_custom_call.1} parent=1 // pred_check_branch
      %76 = sbr.rel (0) target = $region25
    $region24: #{tpu_custom_call.1} parent=1 // pred_region
      %77 = dma.done [#allocation4], 256
    $region25: #{tpu_custom_call.1} parent=1 // pred_fallthru
      _
    // Predicated region
    $region26: #{tpu_custom_call.1} parent=1 // pred_check
      _
    $region27: #{tpu_custom_call.1} parent=1 // pred_check_branch
      %79 = sbr.rel (0) target = $region29
    $region28: #{tpu_custom_call.1} parent=1 // pred_region
      %80 = dma.done [#allocation7], 128
    $region29: #{tpu_custom_call.1} parent=1 // pred_fallthru
      _
    // Predicated region
    $region30: #{tpu_custom_call.1} parent=1 // pred_check
      _
    $region31: #{tpu_custom_call.1} parent=1 // pred_check_branch
      %82 = sbr.rel (0) target = $region33
    $region32: #{tpu_custom_call.1} parent=1 // pred_region
      %83 = dma.done [#allocation7], 128
    $region33: #{tpu_custom_call.1} parent=1 // pred_fallthru
      _
    %84 = vsyncpa [#allocation3], 1
    %85 = vsyncpa [#allocation4], 1
    %86 = vsyncpa [#allocation7], 1

</llo_original>
